<compile_context>
chip_gen: v7x
topology: tpu7x:2x2x1
jax: 0.10.0
libtpu: 0.0.40
codegen_flags: <defaults>
</compile_context>

<pallas_src>
import math

import jax
import jax.numpy as jnp
from jax.experimental import pallas as pl
from jax.experimental.pallas import tpu as pltpu


def _build_pe(max_len: int, d_model: int) -> jnp.ndarray:
    """Deterministic sinusoidal table, identical to the PyTorch __init__ (float32)."""
    position = jnp.arange(0, max_len, dtype=jnp.float32)[:, None]            # (max_len, 1)
    div_term = jnp.exp(
        jnp.arange(0, d_model, 2, dtype=jnp.float32) * (-math.log(10000.0) / d_model)
    )                                                                        # (ceil(d/2),)
    ang = position * div_term                                                # (max_len, ceil(d/2))
    pe = jnp.zeros((max_len, d_model), dtype=jnp.float32)
    pe = pe.at[:, 0::2].set(jnp.sin(ang))
    pe = pe.at[:, 1::2].set(jnp.cos(ang)[:, : d_model // 2])
    return pe                                                                # (max_len, d_model)


def _pos_enc_kernel(x_ref, pe_ref, o_ref):
    # x_ref: (tS, B, D) block, pe_ref: (tS, D) f32 block -> broadcast over batch.
    # Add in float32 (matches the PyTorch float32 buffer add), cast only the output.
    x = x_ref[...].astype(jnp.float32)
    pe = pe_ref[...].astype(jnp.float32)[:, None, :]
    o_ref[...] = (x + pe).astype(o_ref.dtype)
    # NOTE: the (tS,D)->(tS,1,D) broadcast may need cross-sublane work on the XLU,
    # but in this HBM-bound regime the XLU/VPU slots are idle, so it is hidden.


def positional_encoding_forward(
    x: jnp.ndarray,
    pe_table: jnp.ndarray,
    *,
    tile_rows=None,            # override sequence-tile size (rounded to the sublane granule)
    donate_x: bool = False,    # set True only if the caller donates x
    vmem_limit_bytes=None,     # override the auto-derived scoped-VMEM limit
) -> jnp.ndarray:
    """x: (seq_len, batch, d_model); pe_table: (max_len, d_model) float32."""
    S, B, D = x.shape
    max_len, d_model = pe_table.shape
    if d_model != D:
        raise ValueError(f"d_model mismatch: x has {D}, pe_table has {d_model}")
    if S > max_len:
        raise ValueError(f"seq_len {S} exceeds max_len {max_len} of the PE table")
    # NOTE: D % 128 == 0 gives lane-dense (unmasked) stores; smaller D still works
    # but wastes vreg lanes / uses masked vst (production d_model is usually aligned).

    x_item = jnp.dtype(x.dtype).itemsize
    pe_item = jnp.dtype(pe_table.dtype).itemsize

    def _round_up(n, g):
        return ((n + g - 1) // g) * g

    # dtype-aware sublane granule: 8 rows for 4-byte, 16 for 2-byte, 32 for 1-byte.
    granule = max(8, 32 // max(1, min(x_item, pe_item)))
    S_pad = _round_up(S, granule)

    auto_tile = tile_rows is None
    if auto_tile:
        # ~4 MiB per x tile amortizes the ~0.35 us per-grid-step overhead and gets
        # the streaming add close to the HBM roofline on all generations.
        target_bytes = 4 * 1024 * 1024
        tile_rows = max(granule, target_bytes // max(1, B * D * x_item))

    tS = max(granule, (min(int(tile_rows), S_pad) // granule) * granule)

    # Keep the grid >= 2 steps when auto-tiling so v7x's two TensorCores both get
    # work along the "parallel" axis (no-op if the sequence fits a single granule).
    if auto_tile and pl.cdiv(S, tS) == 1 and S_pad > granule:
        tS = min(S_pad, max(granule, _round_up((S + 1) // 2, granule)))

    # Double-buffered VMEM footprint: 2 x (x_in tile + out tile + pe tile).
    def _footprint(ts):
        return 2 * (2 * ts * B * D * x_item + ts * D * pe_item)

    VMEM_SOFT_CAP = 48 * 1024 * 1024   # safe across v5e/v6e (128 MiB) and v7x (64 MiB)
    while tS > granule and _footprint(tS) > VMEM_SOFT_CAP:
        tS = max(granule, ((tS // 2) // granule) * granule)

    if vmem_limit_bytes is None:
        vmem_limit_bytes = int(max(_footprint(tS) + (4 * 1024 * 1024), 32 * 1024 * 1024))

    grid = (pl.cdiv(S, tS),)

    return pl.pallas_call(
        _pos_enc_kernel,
        out_shape=jax.ShapeDtypeStruct((S, B, D), x.dtype),
        grid_spec=pltpu.PrefetchScalarGridSpec(
            num_scalar_prefetch=0,
            grid=grid,
            in_specs=[
                pl.BlockSpec((tS, B, D), lambda i: (i, 0, 0)),   # x tile
                pl.BlockSpec((tS, D), lambda i: (i, 0)),         # pe rows for this tile (f32)
            ],
            out_specs=pl.BlockSpec((tS, B, D), lambda i: (i, 0, 0)),
        ),
        compiler_params=pltpu.CompilerParams(
            dimension_semantics=("parallel",),   # v7x: shard seq tiles across both TCs
            vmem_limit_bytes=vmem_limit_bytes,
        ),
        input_output_aliases=({0: 0} if donate_x else {}),
    )(x, pe_table)


if __name__ == "__main__":
    d_model = 32
    batch = 2

    key = jax.random.PRNGKey(0)
    k1, k2, k3, k4 = jax.random.split(key, 4)

    # ---- case 1: single-tile path --------------------------------------------
    max_len = 64
    seq_len = 8
    pe_table = _build_pe(max_len, d_model)
    x = jax.random.normal(k1, (seq_len, batch, d_model), dtype=jnp.float32)
    out = jax.block_until_ready(positional_encoding_forward(x, pe_table))
    ref = x + pe_table[:seq_len][:, None, :]
    assert out.shape == (seq_len, batch, d_model)
    assert jnp.allclose(out, ref, atol=1e-6), "mismatch vs reference (case 1)"

    # ---- case 2: multi-tile grid with a ragged final sequence tile -----------
    seq_len2 = 20
    x2 = jax.random.normal(k2, (seq_len2, batch, d_model), dtype=jnp.float32)
    out2 = jax.block_until_ready(
        positional_encoding_forward(x2, pe_table, tile_rows=8)   # grid = (3,), last tile partial
    )
    ref2 = x2 + pe_table[:seq_len2][:, None, :]
    assert jnp.allclose(out2, ref2, atol=1e-6), "mismatch vs reference (case 2)"

    # ---- case 3: ragged tile whose pe block extends past max_len -------------
    max_len3 = 60
    seq_len3 = 58
    pe_table3 = _build_pe(max_len3, d_model)
    x3 = jax.random.normal(k3, (seq_len3, batch, d_model), dtype=jnp.float32)
    out3 = jax.block_until_ready(
        positional_encoding_forward(x3, pe_table3, tile_rows=32)  # grid = (2,), tile 1 past max_len
    )
    ref3 = x3 + pe_table3[:seq_len3][:, None, :]
    assert jnp.allclose(out3, ref3, atol=1e-6), "mismatch vs reference (case 3)"

    # ---- case 4: auto tiling splits a single-tile sequence into >= 2 tiles ----
    seq_len4 = 40
    x4 = jax.random.normal(k4, (seq_len4, batch, d_model), dtype=jnp.float32)
    out4 = jax.block_until_ready(positional_encoding_forward(x4, pe_table))
    ref4 = x4 + pe_table[:seq_len4][:, None, :]
    assert jnp.allclose(out4, ref4, atol=1e-6), "mismatch vs reference (case 4)"

    print("KERNEL_OK")
</pallas_src>

<mosaic_0001>
module attributes {stable_mosaic.version = 11 : i64} {
  func.func @_pos_enc_kernel(%arg0: i32, %arg1: memref<8x2x32xf32, #tpu.memory_space<vmem>>, %arg2: memref<8x32xf32, #tpu.memory_space<vmem>>, %arg3: memref<8x2x32xf32, #tpu.memory_space<vmem>>) attributes {dimension_semantics = [#tpu.dimension_semantics<parallel>], iteration_bounds = array<i64: 1>, scalar_prefetch = 0 : i64, scratch_operands = 0 : i64, tpu.core_type = #tpu.core_type<tc>, window_params = [{transform_indices = @transform_0, window_bounds = array<i64: 8, 2, 32>}, {transform_indices = @transform_1, window_bounds = array<i64: 8, 32>}, {transform_indices = @transform_2, window_bounds = array<i64: 8, 2, 32>}]} {
    %c0 = arith.constant 0 : index
    %c0_0 = arith.constant 0 : index
    %c0_1 = arith.constant 0 : index
    %0 = vector.load %arg1[%c0, %c0_0, %c0_1] : memref<8x2x32xf32, #tpu.memory_space<vmem>>, vector<8x2x32xf32>
    %c0_2 = arith.constant 0 : index
    %c0_3 = arith.constant 0 : index
    %1 = vector.load %arg2[%c0_2, %c0_3] : memref<8x32xf32, #tpu.memory_space<vmem>>, vector<8x32xf32>
    %2 = vector.shape_cast %1 : vector<8x32xf32> to vector<8x1x32xf32>
    %3 = vector.broadcast %2 : vector<8x1x32xf32> to vector<8x2x32xf32>
    %4 = arith.addf %0, %3 : vector<8x2x32xf32>
    %c0_4 = arith.constant 0 : index
    %c0_5 = arith.constant 0 : index
    %c0_6 = arith.constant 0 : index
    %5 = vector.load %arg3[%c0_4, %c0_5, %c0_6] : memref<8x2x32xf32, #tpu.memory_space<vmem>>, vector<8x2x32xf32>
    tpu.vector_store %arg3[%c0_4, %c0_5, %c0_6], %4 {strides = array<i32>} : memref<8x2x32xf32, #tpu.memory_space<vmem>>, vector<8x2x32xf32>,
    return
  }
  func.func @transform_0(%arg0: i32) -> (i32, i32, i32) {
    %c0_i32 = arith.constant 0 : i32
    %c0_i32_0 = arith.constant 0 : i32
    %c0_i32_1 = arith.constant 0 : i32
    return %arg0, %c0_i32, %c0_i32_0 : i32, i32, i32
  }
  func.func @transform_1(%arg0: i32) -> (i32, i32) {
    %c0_i32 = arith.constant 0 : i32
    %c0_i32_0 = arith.constant 0 : i32
    return %arg0, %c0_i32 : i32, i32
  }
  func.func @transform_2(%arg0: i32) -> (i32, i32, i32) {
    %c0_i32 = arith.constant 0 : i32
    %c0_i32_0 = arith.constant 0 : i32
    %c0_i32_1 = arith.constant 0 : i32
    return %arg0, %c0_i32, %c0_i32_0 : i32, i32, i32
  }
}

</mosaic_0001>

<llo_original>
// kernel: tpu_custom_call.1
$region0: #{tpu_custom_call.1}
  #allocation0 [shape = 'u32[]', space=smem, size = 0x4, offset = 0x4, fixed_abs, tag = 'smem constant byte address 0x4 - core index']
  #allocation1 [shape = 'u32[144,128]{1,0:T(1,128)}', space=vmem, size = 0x12000, scoped, tag = 'internal scratch']
  %s0 = inlined_call_operand.vmem [shape: f32[8,2,32], index: 0, kind: input, shape index: {}]
  %s1 = inlined_call_operand.vmem [shape: f32[64,32], index: 1, kind: input, shape index: {}]
  %s2 = inlined_call_operand.hbm [shape: f32[8,2,32], index: 2, kind: output, shape index: {}]
  %s3 = sld [smem:[#allocation0]]
  $region18: #{tpu_custom_call.1} parent=0
    _
  %s5 = ssub.s32 1, %s3
  %s6 = scalar_select 0, %s5, %s3
  $region1: #{tpu_custom_call.1} parent=0
    #allocation2 [shape = 'u8[8192]{0}', space=vmem, size = 0x2000, scoped, tag = 'output window, operand 0, single buffered']
    #allocation3 [shape = 's32[1]{0}', space=sflag, size = 0x4, scoped, tag = 'scoped memory for tpu_custom_call.1']
    %7 = vsyncpa [#allocation3], 0
    // Predicated region
    $region2: #{tpu_custom_call.1} parent=1 // pred_check
      _
    $region3: #{tpu_custom_call.1} parent=1 // pred_check_branch
      %9 = sbr.rel (0) target = $region5
    $region4: #{tpu_custom_call.1} parent=1 // pred_region
      _
    $region5: #{tpu_custom_call.1} parent=1 // pred_fallthru
      _
    // Predicated region
    $region6: #{tpu_custom_call.1} parent=1 // pred_check
      _
    $region7: #{tpu_custom_call.1} parent=1 // pred_check_branch
      %11 = sbr.rel (0) target = $region9
    $region8: #{tpu_custom_call.1} parent=1 // pred_region
      _
    $region9: #{tpu_custom_call.1} parent=1 // pred_fallthru
      _
    %v12 = vld [vmem:[%s0] sm:$0x3]
    %v13 = vld [vmem:[%s0 + $0x2] sm:$0x3]
    %v14 = vld [vmem:[%s0 + $0x4] sm:$0x3]
    %v15 = vld [vmem:[%s0 + $0x6] sm:$0x3]
    %v16 = vld [vmem:[%s0 + $0x8] sm:$0x3]
    %v17 = vld [vmem:[%s0 + $0xa] sm:$0x3]
    %v18 = vld [vmem:[%s0 + $0xc] sm:$0x3]
    %v19 = vld [vmem:[%s0 + $0xe] sm:$0x3]
    %v20 = vld [vmem:[%s1] sm:$0xff]
    %v22 = vcombine.high %v20, %v20
    %v24 = vunpack.c.l.s4 1966171168
    %v25 = vunpack.c.0.s8 %v24
    %v26 = vlaneseq
    %v27 = vshrl.u32 %v26, 7
    %v28 = vsub.s32 %v25, %v27
    %v29 = vrot.slane %v20, %v28
    %v31 = vunpack.c.l.s4 1966171168
    %v32 = vunpack.c.0.s8 %v31
    %v33 = vlaneseq
    %v34 = vshrl.u32 %v33, 7
    %v35 = vsub.s32 %v32, %v34
    %v36 = vrot.slane %v22, %v35
    %v37 = vcombine.high %v29, %v29
    %v38 = vcombine.high %v36, %v36
    %v40 = vunpack.c.l.s4 1966171168
    %v41 = vunpack.c.0.s8 %v40
    %v42 = vlaneseq
    %v43 = vshrl.u32 %v42, 7
    %v44 = vsub.s32 %v41, %v43
    %v45 = vrot.slane %v29, %v44
    %v47 = vunpack.c.l.s4 1966171168
    %v48 = vunpack.c.0.s8 %v47
    %v49 = vlaneseq
    %v50 = vshrl.u32 %v49, 7
    %v51 = vsub.s32 %v48, %v50
    %v52 = vrot.slane %v36, %v51
    %v54 = vunpack.c.l.s4 1966171168
    %v55 = vunpack.c.0.s8 %v54
    %v56 = vlaneseq
    %v57 = vshrl.u32 %v56, 7
    %v58 = vsub.s32 %v55, %v57
    %v59 = vrot.slane %v37, %v58
    %v61 = vunpack.c.l.s4 1966171168
    %v62 = vunpack.c.0.s8 %v61
    %v63 = vlaneseq
    %v64 = vshrl.u32 %v63, 7
    %v65 = vsub.s32 %v62, %v64
    %v66 = vrot.slane %v38, %v65
    %v67 = vcombine.high %v45, %v45
    %v68 = vcombine.high %v52, %v52
    %v69 = vcombine.high %v59, %v59
    %v70 = vcombine.high %v66, %v66
    %v71 = vlaneseq
    %v72 = vshrl.u32 %v71, 7
    %v73 = vsub.s32 0, %v72
    %v74 = vrot.slane %v45, %v73
    %v75 = vlaneseq
    %v76 = vshrl.u32 %v75, 7
    %v77 = vsub.s32 0, %v76
    %v78 = vrot.slane %v59, %v77
    %v79 = vlaneseq
    %v80 = vshrl.u32 %v79, 7
    %v81 = vsub.s32 0, %v80
    %v82 = vrot.slane %v67, %v81
    %v83 = vlaneseq
    %v84 = vshrl.u32 %v83, 7
    %v85 = vsub.s32 0, %v84
    %v86 = vrot.slane %v69, %v85
    %v87 = vlaneseq
    %v88 = vshrl.u32 %v87, 7
    %v89 = vsub.s32 0, %v88
    %v90 = vrot.slane %v52, %v89
    %v91 = vlaneseq
    %v92 = vshrl.u32 %v91, 7
    %v93 = vsub.s32 0, %v92
    %v94 = vrot.slane %v66, %v93
    %v95 = vlaneseq
    %v96 = vshrl.u32 %v95, 7
    %v97 = vsub.s32 0, %v96
    %v98 = vrot.slane %v68, %v97
    %v99 = vlaneseq
    %v100 = vshrl.u32 %v99, 7
    %v101 = vsub.s32 0, %v100
    %v102 = vrot.slane %v70, %v101
    %v111 = vadd.f32 %v12, %v74
    %v112 = vadd.f32 %v13, %v78
    %v113 = vadd.f32 %v14, %v82
    %v114 = vadd.f32 %v15, %v86
    %v115 = vadd.f32 %v16, %v90
    %v116 = vadd.f32 %v17, %v94
    %v117 = vadd.f32 %v18, %v98
    %v118 = vadd.f32 %v19, %v102
    %vm119 = vcmask 254976
    %120 = vst.msk [vmem:[#allocation2] sm:$0x3] %vm119, %v111
    %121 = vst.msk [vmem:[#allocation2 + $0x2] sm:$0x3] %vm119, %v112
    %122 = vst.msk [vmem:[#allocation2 + $0x4] sm:$0x3] %vm119, %v113
    %123 = vst.msk [vmem:[#allocation2 + $0x6] sm:$0x3] %vm119, %v114
    %124 = vst.msk [vmem:[#allocation2 + $0x8] sm:$0x3] %vm119, %v115
    %125 = vst.msk [vmem:[#allocation2 + $0xa] sm:$0x3] %vm119, %v116
    %126 = vst.msk [vmem:[#allocation2 + $0xc] sm:$0x3] %vm119, %v117
    %127 = vst.msk [vmem:[#allocation2 + $0xe] sm:$0x3] %vm119, %v118
    // Predicated region
    $region10: #{tpu_custom_call.1} parent=1 // pred_check
      _
    $region11: #{tpu_custom_call.1} parent=1 // pred_check_branch
      %129 = sbr.rel (0) target = $region13
    $region12: #{tpu_custom_call.1} parent=1 // pred_region
      %s131 = ssub.s32 256, 256
      %132 = vsyncadd [#allocation3], %s131
      %s133 = sshll.u32 [#allocation2], 4
      %s134 = int_to_ptr.vmem [resolvable:$true] %s133
      %139 = dma.vmem_to_hbm [thread:$0]  %s134, 256, %s2, [#allocation3], 32, 32, 2
    $region13: #{tpu_custom_call.1} parent=1 // pred_fallthru
      _
    // Predicated region
    $region14: #{tpu_custom_call.1} parent=1 // pred_check
      _
    $region15: #{tpu_custom_call.1} parent=1 // pred_check_branch
      %141 = sbr.rel (0) target = $region17
    $region16: #{tpu_custom_call.1} parent=1 // pred_region
      %142 = dma.done [#allocation3], 256
    $region17: #{tpu_custom_call.1} parent=1 // pred_fallthru
      _
    %143 = vsyncpa [#allocation3], 1

</llo_original>
